<compile_context>
chip_gen: v6e
topology: v6e:2x2x1
jax: 0.10.0
libtpu: 0.0.40
codegen_flags: <defaults>
</compile_context>

<pallas_src>
import jax
import jax.numpy as jnp
from jax.experimental import pallas as pl
from jax.experimental.pallas import tpu as pltpu

BN_EPS = 1e-5
_LANE = 128                                   # lane width: pad H/O to this
_VMEM_FOOTPRINT_BUDGET = 40 * 1024 * 1024     # cap on estimated block footprint
_VMEM_LIMIT_BYTES = 48 * 1024 * 1024          # < v7x 64 MiB physical per TC


def _round_up(x, m):
    return ((x + m - 1) // m) * m


def _fusion_kernel(visn_ref, lang_ref, w1v_ref, w1l_ref, vecs_ref, w2_ref,
                   o_ref):
    Gt, B, V = visn_ref.shape
    L = lang_ref.shape[-1]
    Hp = w1v_ref.shape[-1]
    Op = o_ref.shape[-1]
    cdt = w1v_ref.dtype  # matmul compute dtype (f32 exact, or bf16 MXU-native)

    # fc1 with torch.cat([visn, lang], dim=1) folded away:
    #   [visn | lang] @ w1  ==  visn @ w1_visn + lang @ w1_lang
    # fc1's bias is dropped: training-mode BatchNorm subtracts the per-feature
    # batch mean, which cancels any per-feature constant added before it.
    # NOTE: the (Gt,B,*) <-> (Gt*B,*) reshapes are layout-free when B % 8 == 0.
    visn = visn_ref[...].reshape(Gt * B, V).astype(cdt)
    lang = lang_ref[...].reshape(Gt * B, L).astype(cdt)
    h = (jnp.dot(visn, w1v_ref[...], preferred_element_type=jnp.float32)
         + jnp.dot(lang, w1l_ref[...], preferred_element_type=jnp.float32))

    # Per-group BatchNorm1d (training mode, biased batch stats) in f32.
    # Two-pass (centered) variance for parity with PyTorch numerics; folded
    # with ReLU into one scale/shift + max. rsqrt goes to the EUP slot.
    h3 = h.reshape(Gt, B, Hp)
    mean = jnp.mean(h3, axis=1, keepdims=True)                # (Gt, 1, Hp)
    centered = h3 - mean
    var = jnp.mean(centered * centered, axis=1, keepdims=True)

    vecs = vecs_ref[...]
    gamma = vecs[0:1, :Hp].reshape(1, 1, Hp)
    beta = vecs[1:2, :Hp].reshape(1, 1, Hp)
    b2 = vecs[2:3, :Op]

    scale = gamma * jax.lax.rsqrt(var + BN_EPS)
    hrelu = jnp.maximum(centered * scale + beta, 0.0)         # (Gt, B, Hp)

    # fc2: Linear(H -> O), lane-dense padded output columns stay exactly 0.
    out = jnp.dot(hrelu.reshape(Gt * B, Hp).astype(cdt), w2_ref[...],
                  preferred_element_type=jnp.float32) + b2
    o_ref[...] = out.reshape(Gt, B, Op).astype(o_ref.dtype)


def pack_params(params, visn_dim, compute_dtype=jnp.float32):
    """Pack parameters for the kernel.

    * split w1 at the concat boundary into w1_visn / w1_lang,
    * zero-pad H and O up to multiples of 128 (lane-dense vregs & stores),
    * stack gamma / beta / fc2-bias into one (3, max(Hp, Op)) f32 operand
      (padded entries are 0 so padded columns stay exactly 0),
    * drop fc1's bias (cancelled by training-mode BN mean subtraction),
    * optionally store the matmul weights in bf16 (MXU-native on v6e/v7x).
    """
    w1 = params["w1"].astype(jnp.float32)
    w2 = params["w2"].astype(jnp.float32)
    H = w1.shape[1]
    O = w2.shape[1]
    Hp = _round_up(H, _LANE)
    Op = _round_up(O, _LANE)
    P = max(Hp, Op)

    w1_visn = jnp.pad(w1[:visn_dim, :], ((0, 0), (0, Hp - H)))
    w1_lang = jnp.pad(w1[visn_dim:, :], ((0, 0), (0, Hp - H)))
    w2p = jnp.pad(w2, ((0, Hp - H), (0, Op - O)))

    def row(v, n):
        v = v.reshape(1, -1).astype(jnp.float32)
        return jnp.pad(v, ((0, 0), (0, P - n)))   # pad with 0 (incl. gamma!)

    vecs = jnp.concatenate(
        [row(params["gamma"], H), row(params["beta"], H),
         row(params["b2"], O)], axis=0)

    return {
        "w1_visn": w1_visn.astype(compute_dtype),
        "w1_lang": w1_lang.astype(compute_dtype),
        "w2": w2p.astype(compute_dtype),
        "vecs": vecs,                      # always f32
        "out_dim": O,
    }


def _pick_group_tile(G, B, V, L, Hp, Op, act_bytes, w_bytes,
                     target_rows=256, budget_bytes=_VMEM_FOOTPRINT_BUDGET):
    """How many BN groups to fuse per grid step.

    Fill the MXU M-dimension (Gt*B >= target_rows; 128 already suffices on
    v5e) and amortize per-step grid overhead while keeping the double-buffered
    VMEM footprint within budget (v7x has only 64 MiB VMEM per TensorCore).
    """
    weights = 2 * ((V + L) * Hp + Hp * Op) * w_bytes + 3 * max(Hp, Op) * 4

    def footprint(gt):
        io = 2 * gt * B * ((V + L) * act_bytes + Op * 4)   # double-buffered IO
        tmp = 3 * gt * B * Hp * 4                          # h/centered/relu f32
        return weights + io + tmp

    gt = max(1, min(G, -(-target_rows // B)))              # ceil, capped to G
    while gt > 1 and (G % gt != 0 or footprint(gt) > budget_bytes):
        gt -= 1
    # v7x has 2 TensorCores: prefer >= 2 "parallel" grid blocks when that does
    # not drop a block below ~half the row target.
    if G // gt < 2 and G % 2 == 0 and (G // 2) * B >= target_rows // 2:
        gt = G // 2
    return max(gt, 1)


def att_linear_fusion_layer_batched(lang_feats, visn_feats, packed):
    """Many independent BN micro-batches: lang [G, B, L], visn [G, B, V].

    Each grid step processes Gt whole BN batches (never splits one), so the
    BatchNorm statistics stay exact. The blocked G axis is "parallel" so it
    shards across v7x's two TensorCores.
    """
    G, B, V = visn_feats.shape
    L = lang_feats.shape[-1]
    Hp = packed["w1_visn"].shape[-1]
    Op = packed["w2"].shape[-1]
    O = packed["out_dim"]
    nvec, P = packed["vecs"].shape
    assert packed["w1_visn"].shape[0] == V and packed["w1_lang"].shape[0] == L

    act_bytes = visn_feats.dtype.itemsize
    w_bytes = packed["w1_visn"].dtype.itemsize
    Gt = _pick_group_tile(G, B, V, L, Hp, Op, act_bytes, w_bytes)
    # TODO(synk): if a single BN batch B is ever too large for VMEM (v7x:
    # 64 MiB/TC), switch to a two-pass BN that grids over B-tiles accumulating
    # sum/sumsq in VMEM scratch with a pl.when finalize, instead of holding h.

    out_padded = pl.pallas_call(
        _fusion_kernel,
        out_shape=jax.ShapeDtypeStruct((G, B, Op), jnp.float32),
        grid=(G // Gt,),
        in_specs=[
            pl.BlockSpec((Gt, B, V), lambda g: (g, 0, 0)),   # visn tiles
            pl.BlockSpec((Gt, B, L), lambda g: (g, 0, 0)),   # lang tiles
            pl.BlockSpec((V, Hp), lambda g: (0, 0)),         # w1_visn (resident)
            pl.BlockSpec((L, Hp), lambda g: (0, 0)),         # w1_lang (resident)
            pl.BlockSpec((nvec, P), lambda g: (0, 0)),       # gamma/beta/b2
            pl.BlockSpec((Hp, Op), lambda g: (0, 0)),        # w2 (resident)
        ],
        out_specs=pl.BlockSpec((Gt, B, Op), lambda g: (g, 0, 0)),
        compiler_params=pltpu.CompilerParams(
            dimension_semantics=("parallel",),
            vmem_limit_bytes=_VMEM_LIMIT_BYTES),
    )(visn_feats, lang_feats, packed["w1_visn"], packed["w1_lang"],
      packed["vecs"], packed["w2"])

    return out_padded[..., :O]   # drop zero-padded lane-dense output columns


def att_linear_fusion_layer(lang_feats, visn_feats, packed):
    """Single BN batch:  lang [B, L], visn [B, V]  ->  [B, O]."""
    out = att_linear_fusion_layer_batched(lang_feats[None], visn_feats[None],
                                          packed)
    return out[0]


def init_params(key, d_in, hidden, d_out):
    """Mirrors the module's __init__: Linear weights xavier_uniform, Linear
    biases U(-1/sqrt(fan_in), +), BatchNorm gamma=1 / beta=0. Weights stored
    pre-transposed as [in, out]. b1 is kept for the reference only — the
    kernel drops it because BN's mean subtraction cancels it."""
    k1, k2, k3, k4 = jax.random.split(key, 4)

    def xavier(k, fan_in, fan_out):
        limit = jnp.sqrt(6.0 / (fan_in + fan_out))
        return jax.random.uniform(k, (fan_in, fan_out), jnp.float32,
                                  minval=-limit, maxval=limit)

    def lin_bias(k, fan_in, fan_out):
        bound = 1.0 / jnp.sqrt(fan_in)
        return jax.random.uniform(k, (1, fan_out), jnp.float32,
                                  minval=-bound, maxval=bound)

    return {
        "w1": xavier(k1, d_in, hidden),
        "b1": lin_bias(k2, d_in, hidden),
        "gamma": jnp.ones((1, hidden), jnp.float32),
        "beta": jnp.zeros((1, hidden), jnp.float32),
        "w2": xavier(k3, hidden, d_out),
        "b2": lin_bias(k4, hidden, d_out),
    }


def _reference(lang_feats, visn_feats, params):
    x = jnp.concatenate([visn_feats, lang_feats], axis=1)
    h = x @ params["w1"] + params["b1"]
    mean = jnp.mean(h, axis=0, keepdims=True)
    var = jnp.mean((h - mean) ** 2, axis=0, keepdims=True)
    h = (h - mean) / jnp.sqrt(var + BN_EPS) * params["gamma"] + params["beta"]
    h = jnp.maximum(h, 0.0)
    return h @ params["w2"] + params["b2"]


if __name__ == "__main__":
    key = jax.random.PRNGKey(0)
    k_lang, k_visn, k_params, k_lang2, k_visn2 = jax.random.split(key, 5)

    batch = 8               # multiple of 8 -> free (Gt,B,*)<->(Gt*B,*) reshape
    lang_dim = 8            # lang_feats feature size
    visn_dim = 24           # visn_feats feature size
    d_in = lang_dim + visn_dim   # visn_input_size (concat size)
    hidden = 64             # intermediate_size (padded to 128 in the kernel)
    d_out = 16              # output_size       (padded to 128 in the kernel)

    lang_feats = jax.random.normal(k_lang, (batch, lang_dim), jnp.float32)
    visn_feats = jax.random.normal(k_visn, (batch, visn_dim), jnp.float32)
    params = init_params(k_params, d_in, hidden, d_out)
    ref = _reference(lang_feats, visn_feats, params)

    # --- single BN batch, f32 matmuls (exact) ---
    packed = pack_params(params, visn_dim)               # done once
    out = jax.block_until_ready(
        att_linear_fusion_layer(lang_feats, visn_feats, packed))
    assert out.shape == (batch, d_out)
    assert jnp.allclose(out, ref, atol=2e-4, rtol=2e-4)

    # --- batched path: independent BN micro-batches, Gt-blocked parallel grid ---
    groups = 4
    lang_b = jax.random.normal(k_lang2, (groups, batch, lang_dim), jnp.float32)
    visn_b = jax.random.normal(k_visn2, (groups, batch, visn_dim), jnp.float32)
    out_b = jax.block_until_ready(
        att_linear_fusion_layer_batched(lang_b, visn_b, packed))
    assert out_b.shape == (groups, batch, d_out)
    for g in range(groups):
        ref_g = _reference(lang_b[g], visn_b[g], params)
        assert jnp.allclose(out_b[g], ref_g, atol=2e-4, rtol=2e-4)

    # --- bf16 matmul path (MXU-native on v6e/v7x); BN math stays f32 ---
    packed_bf16 = pack_params(params, visn_dim, compute_dtype=jnp.bfloat16)
    out_bf16 = jax.block_until_ready(
        att_linear_fusion_layer(lang_feats, visn_feats, packed_bf16))
    assert jnp.allclose(out_bf16, ref, atol=6e-2, rtol=6e-2)

    print("KERNEL_OK")
</pallas_src>

<mosaic_0001>
module attributes {stable_mosaic.version = 11 : i64} {
  func.func @_fusion_kernel(%arg0: i32, %arg1: memref<1x8x24xf32, #tpu.memory_space<vmem>>, %arg2: memref<1x8x8xf32, #tpu.memory_space<vmem>>, %arg3: memref<24x128xf32, #tpu.memory_space<vmem>>, %arg4: memref<8x128xf32, #tpu.memory_space<vmem>>, %arg5: memref<3x128xf32, #tpu.memory_space<vmem>>, %arg6: memref<128x128xf32, #tpu.memory_space<vmem>>, %arg7: memref<1x8x128xf32, #tpu.memory_space<vmem>>) attributes {dimension_semantics = [#tpu.dimension_semantics<parallel>], iteration_bounds = array<i64: 1>, scalar_prefetch = 0 : i64, scratch_operands = 0 : i64, tpu.core_type = #tpu.core_type<tc>, window_params = [{transform_indices = @transform_0, window_bounds = array<i64: 1, 8, 24>}, {transform_indices = @transform_1, window_bounds = array<i64: 1, 8, 8>}, {pipeline_mode = #tpu.pipeline_mode<synchronous>, transform_indices = @transform_2, window_bounds = array<i64: 24, 128>}, {pipeline_mode = #tpu.pipeline_mode<synchronous>, transform_indices = @transform_3, window_bounds = array<i64: 8, 128>}, {pipeline_mode = #tpu.pipeline_mode<synchronous>, transform_indices = @transform_4, window_bounds = array<i64: 3, 128>}, {pipeline_mode = #tpu.pipeline_mode<synchronous>, transform_indices = @transform_5, window_bounds = array<i64: 128, 128>}, {transform_indices = @transform_6, window_bounds = array<i64: 1, 8, 128>}]} {
    %c0 = arith.constant 0 : index
    %c0_0 = arith.constant 0 : index
    %c0_1 = arith.constant 0 : index
    %0 = vector.load %arg1[%c0, %c0_0, %c0_1] : memref<1x8x24xf32, #tpu.memory_space<vmem>>, vector<1x8x24xf32>
    %1 = vector.shape_cast %0 : vector<1x8x24xf32> to vector<8x24xf32>
    %c0_2 = arith.constant 0 : index
    %c0_3 = arith.constant 0 : index
    %c0_4 = arith.constant 0 : index
    %2 = vector.load %arg2[%c0_2, %c0_3, %c0_4] : memref<1x8x8xf32, #tpu.memory_space<vmem>>, vector<1x8x8xf32>
    %3 = vector.shape_cast %2 : vector<1x8x8xf32> to vector<8x8xf32>
    %c0_5 = arith.constant 0 : index
    %c0_6 = arith.constant 0 : index
    %4 = vector.load %arg3[%c0_5, %c0_6] : memref<24x128xf32, #tpu.memory_space<vmem>>, vector<24x128xf32>
    %cst = arith.constant dense<0.000000e+00> : vector<8x128xf32>
    %5 = tpu.matmul %1, %4, %cst {dimension_numbers = #tpu.dot_dimension_numbers<[1], [0], [0], [1], [0, 0, 1, 1], [], []>} : vector<8x24xf32>, vector<24x128xf32>, vector<8x128xf32> -> vector<8x128xf32>
    %c0_7 = arith.constant 0 : index
    %c0_8 = arith.constant 0 : index
    %6 = vector.load %arg4[%c0_7, %c0_8] : memref<8x128xf32, #tpu.memory_space<vmem>>, vector<8x128xf32>
    %cst_9 = arith.constant dense<0.000000e+00> : vector<8x128xf32>
    %7 = tpu.matmul %3, %6, %cst_9 {dimension_numbers = #tpu.dot_dimension_numbers<[1], [0], [0], [1], [0, 0, 1, 1], [], []>} : vector<8x8xf32>, vector<8x128xf32>, vector<8x128xf32> -> vector<8x128xf32>
    %8 = arith.addf %5, %7 : vector<8x128xf32>
    %9 = vector.shape_cast %8 : vector<8x128xf32> to vector<1x8x128xf32>
    %cst_10 = arith.constant dense<0.000000e+00> : vector<1x128xf32>
    %10 = vector.multi_reduction <add>, %9, %cst_10 [1] : vector<1x8x128xf32> to vector<1x128xf32>
    %11 = vector.shape_cast %10 : vector<1x128xf32> to vector<1x1x128xf32>
    %cst_11 = arith.constant 8.000000e+00 : f32
    %12 = vector.broadcast %cst_11 : f32 to vector<1x1x128xf32>
    %13 = arith.divf %11, %12 : vector<1x1x128xf32>
    %14 = vector.broadcast %13 : vector<1x1x128xf32> to vector<1x8x128xf32>
    %15 = arith.subf %9, %14 : vector<1x8x128xf32>
    %16 = arith.mulf %15, %15 : vector<1x8x128xf32>
    %cst_12 = arith.constant dense<0.000000e+00> : vector<1x128xf32>
    %17 = vector.multi_reduction <add>, %16, %cst_12 [1] : vector<1x8x128xf32> to vector<1x128xf32>
    %18 = vector.shape_cast %17 : vector<1x128xf32> to vector<1x1x128xf32>
    %cst_13 = arith.constant 8.000000e+00 : f32
    %19 = vector.broadcast %cst_13 : f32 to vector<1x1x128xf32>
    %20 = arith.divf %18, %19 : vector<1x1x128xf32>
    %c0_14 = arith.constant 0 : index
    %c0_15 = arith.constant 0 : index
    %21 = vector.load %arg5[%c0_14, %c0_15] : memref<3x128xf32, #tpu.memory_space<vmem>>, vector<3x128xf32>
    %22 = vector.extract_strided_slice %21 {offsets = [0, 0], sizes = [1, 128], strides = [1, 1]} : vector<3x128xf32> to vector<1x128xf32>
    %23 = vector.shape_cast %22 : vector<1x128xf32> to vector<1x1x128xf32>
    %24 = vector.extract_strided_slice %21 {offsets = [1, 0], sizes = [1, 128], strides = [1, 1]} : vector<3x128xf32> to vector<1x128xf32>
    %25 = vector.shape_cast %24 : vector<1x128xf32> to vector<1x1x128xf32>
    %26 = vector.extract_strided_slice %21 {offsets = [2, 0], sizes = [1, 128], strides = [1, 1]} : vector<3x128xf32> to vector<1x128xf32>
    %cst_16 = arith.constant 9.99999974E-6 : f32
    %27 = vector.broadcast %cst_16 : f32 to vector<1x1x128xf32>
    %28 = arith.addf %20, %27 : vector<1x1x128xf32>
    %29 = math.rsqrt %28 : vector<1x1x128xf32>
    %30 = arith.mulf %23, %29 : vector<1x1x128xf32>
    %31 = vector.broadcast %30 : vector<1x1x128xf32> to vector<1x8x128xf32>
    %32 = arith.mulf %15, %31 : vector<1x8x128xf32>
    %33 = vector.broadcast %25 : vector<1x1x128xf32> to vector<1x8x128xf32>
    %34 = arith.addf %32, %33 : vector<1x8x128xf32>
    %cst_17 = arith.constant 0.000000e+00 : f32
    %35 = vector.broadcast %cst_17 : f32 to vector<1x8x128xf32>
    %36 = arith.maximumf %34, %35 : vector<1x8x128xf32>
    %37 = vector.shape_cast %36 : vector<1x8x128xf32> to vector<8x128xf32>
    %c0_18 = arith.constant 0 : index
    %c0_19 = arith.constant 0 : index
    %38 = vector.load %arg6[%c0_18, %c0_19] : memref<128x128xf32, #tpu.memory_space<vmem>>, vector<128x128xf32>
    %cst_20 = arith.constant dense<0.000000e+00> : vector<8x128xf32>
    %39 = tpu.matmul %37, %38, %cst_20 {dimension_numbers = #tpu.dot_dimension_numbers<[1], [0], [0], [1], [0, 0, 1, 1], [], []>} : vector<8x128xf32>, vector<128x128xf32>, vector<8x128xf32> -> vector<8x128xf32>
    %40 = vector.broadcast %26 : vector<1x128xf32> to vector<8x128xf32>
    %41 = arith.addf %39, %40 : vector<8x128xf32>
    %42 = vector.shape_cast %41 : vector<8x128xf32> to vector<1x8x128xf32>
    %c0_21 = arith.constant 0 : index
    %c0_22 = arith.constant 0 : index
    %c0_23 = arith.constant 0 : index
    %43 = vector.load %arg7[%c0_21, %c0_22, %c0_23] : memref<1x8x128xf32, #tpu.memory_space<vmem>>, vector<1x8x128xf32>
    tpu.vector_store %arg7[%c0_21, %c0_22, %c0_23], %42 {strides = array<i32>} : memref<1x8x128xf32, #tpu.memory_space<vmem>>, vector<1x8x128xf32>,
    return
  }
  func.func @transform_0(%arg0: i32) -> (i32, i32, i32) {
    %c0_i32 = arith.constant 0 : i32
    %c0_i32_0 = arith.constant 0 : i32
    %c0_i32_1 = arith.constant 0 : i32
    return %arg0, %c0_i32, %c0_i32_0 : i32, i32, i32
  }
  func.func @transform_1(%arg0: i32) -> (i32, i32, i32) {
    %c0_i32 = arith.constant 0 : i32
    %c0_i32_0 = arith.constant 0 : i32
    %c0_i32_1 = arith.constant 0 : i32
    return %arg0, %c0_i32, %c0_i32_0 : i32, i32, i32
  }
  func.func @transform_2(%arg0: i32) -> (i32, i32) {
    %c0_i32 = arith.constant 0 : i32
    %c0_i32_0 = arith.constant 0 : i32
    %c0_i32_1 = arith.constant 0 : i32
    return %c0_i32, %c0_i32_0 : i32, i32
  }
  func.func @transform_3(%arg0: i32) -> (i32, i32) {
    %c0_i32 = arith.constant 0 : i32
    %c0_i32_0 = arith.constant 0 : i32
    %c0_i32_1 = arith.constant 0 : i32
    return %c0_i32, %c0_i32_0 : i32, i32
  }
  func.func @transform_4(%arg0: i32) -> (i32, i32) {
    %c0_i32 = arith.constant 0 : i32
    %c0_i32_0 = arith.constant 0 : i32
    %c0_i32_1 = arith.constant 0 : i32
    return %c0_i32, %c0_i32_0 : i32, i32
  }
  func.func @transform_5(%arg0: i32) -> (i32, i32) {
    %c0_i32 = arith.constant 0 : i32
    %c0_i32_0 = arith.constant 0 : i32
    %c0_i32_1 = arith.constant 0 : i32
    return %c0_i32, %c0_i32_0 : i32, i32
  }
  func.func @transform_6(%arg0: i32) -> (i32, i32, i32) {
    %c0_i32 = arith.constant 0 : i32
    %c0_i32_0 = arith.constant 0 : i32
    %c0_i32_1 = arith.constant 0 : i32
    return %arg0, %c0_i32, %c0_i32_0 : i32, i32, i32
  }
}

</mosaic_0001>

<llo_original>
// kernel: tpu_custom_call.1
$region0: #{tpu_custom_call.1}
  #allocation0 [shape = 'u32[]', space=smem, size = 0x4, offset = 0x4, fixed_abs, tag = 'smem constant byte address 0x4 - core index']
  #allocation1 [shape = 'u32[144,128]{1,0:T(1,128)}', space=vmem, size = 0x12000, scoped, tag = 'internal scratch']
  %s0 = inlined_call_operand.hbm [shape: f32[1,8,24], index: 0, kind: input, shape index: {}]
  %s1 = inlined_call_operand.hbm [shape: f32[1,8,8], index: 1, kind: input, shape index: {}]
  %s2 = inlined_call_operand.hbm [shape: f32[24,128], index: 2, kind: input, shape index: {}]
  %s3 = inlined_call_operand.hbm [shape: f32[8,128], index: 3, kind: input, shape index: {}]
  %s4 = inlined_call_operand.vmem [shape: f32[3,128], index: 4, kind: input, shape index: {}]
  %s5 = inlined_call_operand.hbm [shape: f32[128,128], index: 5, kind: input, shape index: {}]
  %s6 = inlined_call_operand.hbm [shape: f32[1,8,128], index: 6, kind: output, shape index: {}]
  %s7 = sld [smem:[#allocation0]]
  $region54: #{tpu_custom_call.1} parent=0
    _
  %s9 = ssub.s32 1, %s7
  %s10 = scalar_select 0, %s9, %s7
  $region1: #{tpu_custom_call.1} parent=0
    #allocation2 [shape = 'u8[4096]{0}', space=vmem, size = 0x1000, scoped, tag = 'input window, operand 0, single buffered']
    #allocation3 [shape = 's32[1]{0}', space=sflag, size = 0x4, scoped, tag = 'scoped memory for tpu_custom_call.1']
    #allocation4 [shape = 's32[1]{0}', space=sflag, size = 0x4, scoped, tag = 'scoped memory for tpu_custom_call.1']
    #allocation5 [shape = 'u8[4096]{0}', space=vmem, size = 0x1000, scoped, tag = 'input window, operand 1, single buffered']
    #allocation6 [shape = 's32[1]{0}', space=sflag, size = 0x4, scoped, tag = 'scoped memory for tpu_custom_call.1']
    #allocation7 [shape = 'u8[12288]{0}', space=vmem, size = 0x3000, scoped, tag = 'input window, operand 2, single buffered']
    #allocation8 [shape = 'u8[4096]{0}', space=vmem, size = 0x1000, scoped, tag = 'input window, operand 3, single buffered']
    #allocation9 [shape = 's32[1]{0}', space=sflag, size = 0x4, scoped, tag = 'scoped memory for tpu_custom_call.1']
    #allocation10 [shape = 'u8[65536]{0}', space=vmem, size = 0x10000, scoped, tag = 'input window, operand 5, single buffered']
    #allocation11 [shape = 'u8[4096]{0}', space=vmem, size = 0x1000, scoped, tag = 'output window, operand 0, single buffered']
    %11 = vsyncpa [#allocation3], 0
    %12 = vsyncpa [#allocation6], 0
    %13 = vsyncpa [#allocation9], 0
    %14 = vsyncpa [#allocation4], 0
    // Predicated region
    $region2: #{tpu_custom_call.1} parent=1 // pred_check
      _
    $region3: #{tpu_custom_call.1} parent=1 // pred_check_branch
      %16 = sbr.rel (0) target = $region5
    $region4: #{tpu_custom_call.1} parent=1 // pred_region
      %s18 = ssub.s32 128, 128
      %19 = vsyncadd [#allocation3], %s18
      %s21 = sshll.u32 [#allocation2], 4
      %s22 = int_to_ptr.vmem [resolvable:$true] %s21
      %24 = dma.hbm_to_vmem [thread:$0]  %s0, 128, %s22, [#allocation3]
    $region5: #{tpu_custom_call.1} parent=1 // pred_fallthru
      _
    // Predicated region
    $region6: #{tpu_custom_call.1} parent=1 // pred_check
      _
    $region7: #{tpu_custom_call.1} parent=1 // pred_check_branch
      %26 = sbr.rel (0) target = $region9
    $region8: #{tpu_custom_call.1} parent=1 // pred_region
      %s28 = ssub.s32 128, 128
      %29 = vsyncadd [#allocation6], %s28
      %s31 = sshll.u32 [#allocation5], 4
      %s32 = int_to_ptr.vmem [resolvable:$true] %s31
      %34 = dma.hbm_to_vmem [thread:$0]  %s1, 128, %s32, [#allocation6]
    $region9: #{tpu_custom_call.1} parent=1 // pred_fallthru
      _
    // Predicated region
    $region10: #{tpu_custom_call.1} parent=1 // pred_check
      _
    $region11: #{tpu_custom_call.1} parent=1 // pred_check_branch
      %36 = sbr.rel (0) target = $region13
    $region12: #{tpu_custom_call.1} parent=1 // pred_region
      %s38 = ssub.s32 384, 384
      %39 = vsyncadd [#allocation6], %s38
      %s40 = sshll.u32 [#allocation7], 4
      %s41 = int_to_ptr.vmem [resolvable:$true] %s40
      %46 = dma.hbm_to_vmem [thread:$0]  %s2, 384, %s41, [#allocation6], 128, 128, 8
    $region13: #{tpu_custom_call.1} parent=1 // pred_fallthru
      _
    // Predicated region
    $region14: #{tpu_custom_call.1} parent=1 // pred_check
      _
    $region15: #{tpu_custom_call.1} parent=1 // pred_check_branch
      %48 = sbr.rel (0) target = $region17
    $region16: #{tpu_custom_call.1} parent=1 // pred_region
      %s50 = ssub.s32 128, 128
      %51 = vsyncadd [#allocation9], %s50
      %s53 = sshll.u32 [#allocation8], 4
      %s54 = int_to_ptr.vmem [resolvable:$true] %s53
      %56 = dma.hbm_to_vmem [thread:$0]  %s3, 128, %s54, [#allocation9]
    $region17: #{tpu_custom_call.1} parent=1 // pred_fallthru
      _
    // Predicated region
    $region18: #{tpu_custom_call.1} parent=1 // pred_check
      _
    $region19: #{tpu_custom_call.1} parent=1 // pred_check_branch
      %58 = sbr.rel (0) target = $region21
    $region20: #{tpu_custom_call.1} parent=1 // pred_region
      _
    $region21: #{tpu_custom_call.1} parent=1 // pred_fallthru
      _
    // Predicated region
    $region22: #{tpu_custom_call.1} parent=1 // pred_check
      _
    $region23: #{tpu_custom_call.1} parent=1 // pred_check_branch
      %60 = sbr.rel (0) target = $region25
    $region24: #{tpu_custom_call.1} parent=1 // pred_region
      %s62 = ssub.s32 2048, 2048
      %63 = vsyncadd [#allocation9], %s62
      %s64 = sshll.u32 [#allocation10], 4
      %s65 = int_to_ptr.vmem [resolvable:$true] %s64
      %70 = dma.hbm_to_vmem [thread:$0]  %s5, 2048, %s65, [#allocation9], 128, 128, 8
    $region25: #{tpu_custom_call.1} parent=1 // pred_fallthru
      _
    // Predicated region
    $region26: #{tpu_custom_call.1} parent=1 // pred_check
      _
    $region27: #{tpu_custom_call.1} parent=1 // pred_check_branch
      %72 = sbr.rel (0) target = $region29
    $region28: #{tpu_custom_call.1} parent=1 // pred_region
      %73 = dma.done [#allocation3], 128
    $region29: #{tpu_custom_call.1} parent=1 // pred_fallthru
      _
    // Predicated region
    $region30: #{tpu_custom_call.1} parent=1 // pred_check
      _
    $region31: #{tpu_custom_call.1} parent=1 // pred_check_branch
      %75 = sbr.rel (0) target = $region33
    $region32: #{tpu_custom_call.1} parent=1 // pred_region
      %76 = dma.done [#allocation6], 128
    $region33: #{tpu_custom_call.1} parent=1 // pred_fallthru
      _
    // Predicated region
    $region34: #{tpu_custom_call.1} parent=1 // pred_check
      _
    $region35: #{tpu_custom_call.1} parent=1 // pred_check_branch
      %78 = sbr.rel (0) target = $region37
    $region36: #{tpu_custom_call.1} parent=1 // pred_region
      %79 = dma.done [#allocation6], 384
    $region37: #{tpu_custom_call.1} parent=1 // pred_fallthru
      _
    // Predicated region
    $region38: #{tpu_custom_call.1} parent=1 // pred_check
      _
    $region39: #{tpu_custom_call.1} parent=1 // pred_check_branch
      %81 = sbr.rel (0) target = $region41
    $region40: #{tpu_custom_call.1} parent=1 // pred_region
      %82 = dma.done [#allocation9], 128
    $region41: #{tpu_custom_call.1} parent=1 // pred_fallthru
      _
    // Predicated region
    $region42: #{tpu_custom_call.1} parent=1 // pred_check
      _
    $region43: #{tpu_custom_call.1} parent=1 // pred_check_branch
      %84 = sbr.rel (0) target = $region45
    $region44: #{tpu_custom_call.1} parent=1 // pred_region
      %85 = dma.done [#allocation9], 2048
    $region45: #{tpu_custom_call.1} parent=1 // pred_fallthru
      _
    %v86 = vld [vmem:[#allocation2] sm:$0xff]
    %v87 = vld [vmem:[#allocation5] sm:$0xff]
    %v88 = vld [vmem:[#allocation7] sm:$0xff]
    %v89 = vld [vmem:[#allocation7 + $0x8] sm:$0xff]
    %v90 = vld [vmem:[#allocation7 + $0x10] sm:$0xff]
    %v91 = vld [vmem:[#allocation8] sm:$0xff]
    %vm92 = vcmask 64512
    %v94 = vsel %vm92, %v87, 0
    %96 = vmatprep.subr.mxu0 0.0
    %97 = vmatpush1.msra.mxu0 0.0
    %98 = vmatprep.subr.mxu0 0.0
    %99 = vmatpush1.msra.mxu0 0.0
    %100 = vmatprep.subr.mxu0 0.0
    %101 = vmatpush1.msra.mxu0 0.0
    %102 = vmatprep.subr.mxu0 0.0
    %103 = vmatpush1.msra.mxu0 0.0
    %104 = vmatprep.subr.mxu0 0.0
    %105 = vmatpush1.msra.mxu0 0.0
    %106 = vmatprep.subr.mxu0 0.0
    %107 = vmatpush1.msra.mxu0 0.0
    %108 = vmatprep.subr.mxu0 0.0
    %109 = vmatpush1.msra.mxu0 0.0
    %110 = vmatprep.subr.mxu0 0.0
    %111 = vmatpush1.msra.mxu0 0.0
    %112 = vmatprep.subr.mxu0 0.0
    %113 = vmatpush1.msra.mxu0 0.0
    %114 = vmatprep.subr.mxu0 0.0
    %115 = vmatpush1.msra.mxu0 0.0
    %116 = vmatprep.subr.mxu0 0.0
    %117 = vmatpush1.msra.mxu0 0.0
    %118 = vmatprep.subr.mxu0 0.0
    %119 = vmatpush1.msra.mxu0 0.0
    %120 = vmatprep.subr.mxu0 0.0
    %121 = vmatpush1.msra.mxu0 0.0
    %122 = vmatprep.subr.mxu0 0.0
    %123 = vmatpush1.msra.mxu0 0.0
    %124 = vmatprep.subr.mxu0 0.0
    %125 = vmatpush1.msra.mxu0 0.0
    %126 = vmatprep.subr.mxu0 0.0
    %127 = vmatpush1.msra.mxu0 %v91
    %128 = vmatprep.subr.mxu0 0.0
    %129 = vmatpush2.msra.mxu0 0.0
    %130 = vmatprep.subr.mxu0 0.0
    %131 = vmatpush2.msra.mxu0 0.0
    %132 = vmatprep.subr.mxu0 0.0
    %133 = vmatpush2.msra.mxu0 0.0
    %134 = vmatprep.subr.mxu0 0.0
    %135 = vmatpush2.msra.mxu0 0.0
    %136 = vmatprep.subr.mxu0 0.0
    %137 = vmatpush2.msra.mxu0 0.0
    %138 = vmatprep.subr.mxu0 0.0
    %139 = vmatpush2.msra.mxu0 0.0
    %140 = vmatprep.subr.mxu0 0.0
    %141 = vmatpush2.msra.mxu0 0.0
    %142 = vmatprep.subr.mxu0 0.0
    %143 = vmatpush2.msra.mxu0 0.0
    %144 = vmatprep.subr.mxu0 0.0
    %145 = vmatpush2.msra.mxu0 0.0
    %146 = vmatprep.subr.mxu0 0.0
    %147 = vmatpush2.msra.mxu0 0.0
    %148 = vmatprep.subr.mxu0 0.0
    %149 = vmatpush2.msra.mxu0 0.0
    %150 = vmatprep.subr.mxu0 0.0
    %151 = vmatpush2.msra.mxu0 0.0
    %152 = vmatprep.subr.mxu0 0.0
    %153 = vmatpush2.msra.mxu0 0.0
    %154 = vmatprep.subr.mxu0 0.0
    %155 = vmatpush2.msra.mxu0 0.0
    %156 = vmatprep.subr.mxu0 0.0
    %157 = vmatpush2.msra.mxu0 0.0
    %158 = vmatprep.subr.mxu0 0.0
    %159 = vmatpush2.msra.mxu0 0.0
    %160 = vmatprep.mubr.f32.mxu0 0.0
    %161 = vmatmul.mubr.f32.gmra.mxu0 %v94
    %v162 = vpop.f32.mrf.mxu0
    %v163 = vadd.f32 0.0, %v162
    %v164 = vpop.f32.mrf.mxu0
    %165 = vdwg.mxu0
    %vm166 = vcmask 195584
    %v168 = vsel %vm166, %v86, 0
    %170 = vmatprep.subr.mxu0 0.0
    %171 = vmatpush1.msra.mxu0 0.0
    %172 = vmatprep.subr.mxu0 0.0
    %173 = vmatpush1.msra.mxu0 0.0
    %174 = vmatprep.subr.mxu0 0.0
    %175 = vmatpush1.msra.mxu0 0.0
    %176 = vmatprep.subr.mxu0 0.0
    %177 = vmatpush1.msra.mxu0 0.0
    %178 = vmatprep.subr.mxu0 0.0
    %179 = vmatpush1.msra.mxu0 0.0
    %180 = vmatprep.subr.mxu0 0.0
    %181 = vmatpush1.msra.mxu0 0.0
    %182 = vmatprep.subr.mxu0 0.0
    %183 = vmatpush1.msra.mxu0 0.0
    %184 = vmatprep.subr.mxu0 0.0
    %185 = vmatpush1.msra.mxu0 0.0
    %186 = vmatprep.subr.mxu0 0.0
    %187 = vmatpush1.msra.mxu0 0.0
    %188 = vmatprep.subr.mxu0 0.0
    %189 = vmatpush1.msra.mxu0 0.0
    %190 = vmatprep.subr.mxu0 0.0
    %191 = vmatpush1.msra.mxu0 0.0
    %192 = vmatprep.subr.mxu0 0.0
    %193 = vmatpush1.msra.mxu0 0.0
    %194 = vmatprep.subr.mxu0 0.0
    %195 = vmatpush1.msra.mxu0 0.0
    %196 = vmatprep.subr.mxu0 0.0
    %197 = vmatpush1.msra.mxu0 %v90
    %198 = vmatprep.subr.mxu0 0.0
    %199 = vmatpush1.msra.mxu0 %v89
    %200 = vmatprep.subr.mxu0 0.0
    %201 = vmatpush1.msra.mxu0 %v88
    %202 = vmatprep.subr.mxu0 0.0
    %203 = vmatpush2.msra.mxu0 0.0
    %204 = vmatprep.subr.mxu0 0.0
    %205 = vmatpush2.msra.mxu0 0.0
    %206 = vmatprep.subr.mxu0 0.0
    %207 = vmatpush2.msra.mxu0 0.0
    %208 = vmatprep.subr.mxu0 0.0
    %209 = vmatpush2.msra.mxu0 0.0
    %210 = vmatprep.subr.mxu0 0.0
    %211 = vmatpush2.msra.mxu0 0.0
    %212 = vmatprep.subr.mxu0 0.0
    %213 = vmatpush2.msra.mxu0 0.0
    %214 = vmatprep.subr.mxu0 0.0
    %215 = vmatpush2.msra.mxu0 0.0
    %216 = vmatprep.subr.mxu0 0.0
    %217 = vmatpush2.msra.mxu0 0.0
    %218 = vmatprep.subr.mxu0 0.0
    %219 = vmatpush2.msra.mxu0 0.0
    %220 = vmatprep.subr.mxu0 0.0
    %221 = vmatpush2.msra.mxu0 0.0
    %222 = vmatprep.subr.mxu0 0.0
    %223 = vmatpush2.msra.mxu0 0.0
    %224 = vmatprep.subr.mxu0 0.0
    %225 = vmatpush2.msra.mxu0 0.0
    %226 = vmatprep.subr.mxu0 0.0
    %227 = vmatpush2.msra.mxu0 0.0
    %228 = vmatprep.subr.mxu0 0.0
    %229 = vmatpush2.msra.mxu0 0.0
    %230 = vmatprep.subr.mxu0 0.0
    %231 = vmatpush2.msra.mxu0 0.0
    %232 = vmatprep.subr.mxu0 0.0
    %233 = vmatpush2.msra.mxu0 0.0
    %234 = vmatprep.mubr.f32.mxu0 0.0
    %235 = vmatmul.mubr.f32.gmra.mxu0 %v168
    %v236 = vpop.f32.mrf.mxu0
    %v237 = vadd.f32 %v163, %v236
    %v238 = vpop.f32.mrf.mxu0
    %239 = vdwg.mxu0
    %v240 = vrot.slane %v237, 4
    %v241 = vadd.f32 %v237, %v240
    %v242 = vrot.slane %v241, 2
    %v243 = vadd.f32 %v241, %v242
    %v244 = vrot.slane %v243, 1
    %v245 = vadd.f32 %v243, %v244
    %v246 = vrcp.pop 8.0
    %v247 = vmul.f32 %v245, %v246
    %v248 = vsub.f32 %v237, %v247
    %v249 = vmul.f32 %v248, %v248
    %v250 = vrot.slane %v249, 4
    %v251 = vadd.f32 %v249, %v250
    %v252 = vrot.slane %v251, 2
    %v253 = vadd.f32 %v251, %v252
    %v254 = vrot.slane %v253, 1
    %v255 = vadd.f32 %v253, %v254
    %v256 = vmul.f32 %v255, %v246
    %v257 = vld [vmem:[%s4] sm:$0x7]
    %v258 = vadd.f32 %v256, 1e-05
    %v259 = vrsqrt.pop %v258
    %v260 = vmul.f32 %v257, %v259
    %v261 = vlaneseq
    %v262 = vshrl.u32 %v261, 7
    %v263 = vsub.s32 0, %v262
    %v264 = vrot.slane %v260, %v263
    %v265 = vmul.f32 %v248, %v264
    %v266 = vlaneseq
    %v267 = vshrl.u32 %v266, 7
    %v268 = vsub.s32 1, %v267
    %v269 = vrot.slane %v257, %v268
    %v270 = vadd.f32 %v265, %v269
    %v271 = vmax.f32 %v270, 0.0
    %v272 = vld [vmem:[#allocation10] sm:$0xff]
    %v273 = vld [vmem:[#allocation10 + $0x8] sm:$0xff]
    %v274 = vld [vmem:[#allocation10 + $0x10] sm:$0xff]
    %v275 = vld [vmem:[#allocation10 + $0x18] sm:$0xff]
    %v276 = vld [vmem:[#allocation10 + $0x20] sm:$0xff]
    %v277 = vld [vmem:[#allocation10 + $0x28] sm:$0xff]
    %v278 = vld [vmem:[#allocation10 + $0x30] sm:$0xff]
    %v279 = vld [vmem:[#allocation10 + $0x38] sm:$0xff]
    %v280 = vld [vmem:[#allocation10 + $0x40] sm:$0xff]
    %v281 = vld [vmem:[#allocation10 + $0x48] sm:$0xff]
    %v282 = vld [vmem:[#allocation10 + $0x50] sm:$0xff]
    %v283 = vld [vmem:[#allocation10 + $0x58] sm:$0xff]
    %v284 = vld [vmem:[#allocation10 + $0x60] sm:$0xff]
    %v285 = vld [vmem:[#allocation10 + $0x68] sm:$0xff]
    %v286 = vld [vmem:[#allocation10 + $0x70] sm:$0xff]
    %v287 = vld [vmem:[#allocation10 + $0x78] sm:$0xff]
    %v288 = vlaneseq
    %v289 = vshrl.u32 %v288, 7
    %v290 = vsub.s32 2, %v289
    %v291 = vrot.slane %v257, %v290
    %292 = vmatprep.subr.mxu0 0.0
    %293 = vmatpush1.msra.mxu0 %v287
    %294 = vmatprep.subr.mxu0 0.0
    %295 = vmatpush1.msra.mxu0 %v286
    %296 = vmatprep.subr.mxu0 0.0
    %297 = vmatpush1.msra.mxu0 %v285
    %298 = vmatprep.subr.mxu0 0.0
    %299 = vmatpush1.msra.mxu0 %v284
    %300 = vmatprep.subr.mxu0 0.0
    %301 = vmatpush1.msra.mxu0 %v283
    %302 = vmatprep.subr.mxu0 0.0
    %303 = vmatpush1.msra.mxu0 %v282
    %304 = vmatprep.subr.mxu0 0.0
    %305 = vmatpush1.msra.mxu0 %v281
    %306 = vmatprep.subr.mxu0 0.0
    %307 = vmatpush1.msra.mxu0 %v280
    %308 = vmatprep.subr.mxu0 0.0
    %309 = vmatpush1.msra.mxu0 %v279
    %310 = vmatprep.subr.mxu0 0.0
    %311 = vmatpush1.msra.mxu0 %v278
    %312 = vmatprep.subr.mxu0 0.0
    %313 = vmatpush1.msra.mxu0 %v277
    %314 = vmatprep.subr.mxu0 0.0
    %315 = vmatpush1.msra.mxu0 %v276
    %316 = vmatprep.subr.mxu0 0.0
    %317 = vmatpush1.msra.mxu0 %v275
    %318 = vmatprep.subr.mxu0 0.0
    %319 = vmatpush1.msra.mxu0 %v274
    %320 = vmatprep.subr.mxu0 0.0
    %321 = vmatpush1.msra.mxu0 %v273
    %322 = vmatprep.subr.mxu0 0.0
    %323 = vmatpush1.msra.mxu0 %v272
    %324 = vmatprep.subr.mxu0 0.0
    %325 = vmatpush2.msra.mxu0 0.0
    %326 = vmatprep.subr.mxu0 0.0
    %327 = vmatpush2.msra.mxu0 0.0
    %328 = vmatprep.subr.mxu0 0.0
    %329 = vmatpush2.msra.mxu0 0.0
    %330 = vmatprep.subr.mxu0 0.0
    %331 = vmatpush2.msra.mxu0 0.0
    %332 = vmatprep.subr.mxu0 0.0
    %333 = vmatpush2.msra.mxu0 0.0
    %334 = vmatprep.subr.mxu0 0.0
    %335 = vmatpush2.msra.mxu0 0.0
    %336 = vmatprep.subr.mxu0 0.0
    %337 = vmatpush2.msra.mxu0 0.0
    %338 = vmatprep.subr.mxu0 0.0
    %339 = vmatpush2.msra.mxu0 0.0
    %340 = vmatprep.subr.mxu0 0.0
    %341 = vmatpush2.msra.mxu0 0.0
    %342 = vmatprep.subr.mxu0 0.0
    %343 = vmatpush2.msra.mxu0 0.0
    %344 = vmatprep.subr.mxu0 0.0
    %345 = vmatpush2.msra.mxu0 0.0
    %346 = vmatprep.subr.mxu0 0.0
    %347 = vmatpush2.msra.mxu0 0.0
    %348 = vmatprep.subr.mxu0 0.0
    %349 = vmatpush2.msra.mxu0 0.0
    %350 = vmatprep.subr.mxu0 0.0
    %351 = vmatpush2.msra.mxu0 0.0
    %352 = vmatprep.subr.mxu0 0.0
    %353 = vmatpush2.msra.mxu0 0.0
    %354 = vmatprep.subr.mxu0 0.0
    %355 = vmatpush2.msra.mxu0 0.0
    %356 = vmatprep.mubr.f32.mxu0 0.0
    %357 = vmatmul.mubr.f32.gmra.mxu0 %v271
    %v358 = vpop.f32.mrf.mxu0
    %v359 = vadd.f32 %v291, %v358
    %v360 = vpop.f32.mrf.mxu0
    %361 = vdwg.mxu0
    %362 = vst [vmem:[#allocation11] sm:$0xff] %v359
    // Predicated region
    $region46: #{tpu_custom_call.1} parent=1 // pred_check
      _
    $region47: #{tpu_custom_call.1} parent=1 // pred_check_branch
      %364 = sbr.rel (0) target = $region49
    $region48: #{tpu_custom_call.1} parent=1 // pred_region
      %s366 = ssub.s32 128, 128
      %367 = vsyncadd [#allocation4], %s366
      %s369 = sshll.u32 [#allocation11], 4
      %s370 = int_to_ptr.vmem [resolvable:$true] %s369
      %372 = dma.vmem_to_hbm [thread:$0]  %s370, 128, %s6, [#allocation4]
    $region49: #{tpu_custom_call.1} parent=1 // pred_fallthru
      _
    // Predicated region
    $region50: #{tpu_custom_call.1} parent=1 // pred_check
      _
    $region51: #{tpu_custom_call.1} parent=1 // pred_check_branch
      %374 = sbr.rel (0) target = $region53
    $region52: #{tpu_custom_call.1} parent=1 // pred_region
      %375 = dma.done [#allocation4], 128
    $region53: #{tpu_custom_call.1} parent=1 // pred_fallthru
      _
    %376 = vsyncpa [#allocation3], 1
    %377 = vsyncpa [#allocation6], 1
    %378 = vsyncpa [#allocation9], 1
    %379 = vsyncpa [#allocation4], 1

</llo_original>
